<compile_context>
chip_gen: v7x
topology: tpu7x:2x2x1
jax: 0.10.0
libtpu: 0.0.40
codegen_flags: <defaults>
</compile_context>

<pallas_src>
import jax
import jax.numpy as jnp
from jax.experimental import pallas as pl
from jax.experimental.pallas import tpu as pltpu

# ---------------- logical (PyTorch) dims ----------------
IN_DIM = 26 * 6   # 156
S1 = 100
S2 = 10
Z_DIM = 2

# ---------------- lane-padded hidden dims ----------------
S1_P = 128        # 100 -> 128
S2_P = 128        # 10  -> 128

LAYER_DIMS = [
    (IN_DIM, S1), (S1, S2), (S2, Z_DIM),     # encoder
    (Z_DIM, S2), (S2, S1), (S1, IN_DIM),     # decoder
]
HAS_SIGMOID = [True, True, False, True, True, True]

MAX_TB = 1024     # big tiles: per-step DMA >> fixed ~0.35us per-step overhead


def _round_up(n, m):
    return ((n + m - 1) // m) * m


def _sigmoid_bf16(x_f32):
    """sigmoid(x) = 0.5*(tanh(x/2)+1), tanh evaluated in bf16.

    Single EUP transcendental; bf16 tanh halves EUP work on v6e/v7x and the
    bf16 result feeds the next MXU dot directly (no extra cast).
    """
    t = jnp.tanh((0.5 * x_f32).astype(jnp.bfloat16))
    return 0.5 * (t + 1.0)                       # stays bf16


def autoencoder_kernel(x_ref,
                       w1_ref, b1_ref, w2_ref, b2_ref, w34_ref, b34_ref,
                       w5_ref, b5_ref, w6_ref, b6_ref,
                       out_ref):
    x = x_ref[...].astype(jnp.bfloat16)                                   # (TB, 156)

    # encoder: Linear(156->100) -> Sigmoid -> Linear(100->10) -> Sigmoid
    h = jnp.dot(x, w1_ref[...], preferred_element_type=jnp.float32) + b1_ref[...]
    h = _sigmoid_bf16(h)                                                  # (TB, 128) bf16
    h = jnp.dot(h, w2_ref[...], preferred_element_type=jnp.float32) + b2_ref[...]
    h = _sigmoid_bf16(h)                                                  # (TB, 128) bf16

    # fused (encoder Linear(10->2)) @ (decoder Linear(2->10)), no activation between
    h = jnp.dot(h, w34_ref[...], preferred_element_type=jnp.float32) + b34_ref[...]
    h = _sigmoid_bf16(h)

    # decoder tail: Linear(10->100) -> Sigmoid -> Linear(100->156) -> Sigmoid
    h = jnp.dot(h, w5_ref[...], preferred_element_type=jnp.float32) + b5_ref[...]
    h = _sigmoid_bf16(h)
    y = jnp.dot(h, w6_ref[...], preferred_element_type=jnp.float32) + b6_ref[...]
    out_ref[...] = _sigmoid_bf16(y)                                       # bf16 (TB, 156)


def init_params(key):
    """PyTorch nn.Linear default init: U[-1/sqrt(fan_in), 1/sqrt(fan_in)].

    Returns a list of (w [in, out] f32, b [out] f32) — weights stored
    transposed vs. PyTorch so forward is x @ W + b.
    """
    params = []
    for fan_in, fan_out in LAYER_DIMS:
        key, kw, kb = jax.random.split(key, 3)
        bound = 1.0 / (fan_in ** 0.5)
        w = jax.random.uniform(kw, (fan_in, fan_out), jnp.float32, -bound, bound)
        b = jax.random.uniform(kb, (fan_out,), jnp.float32, -bound, bound)
        params.append((w, b))
    return params


def _pad_weight(w, in_p, out_p):
    wp = jnp.zeros((in_p, out_p), jnp.bfloat16)
    return wp.at[: w.shape[0], : w.shape[1]].set(w.astype(jnp.bfloat16))


def _pad_bias(b, out_p):
    bp = jnp.zeros((1, out_p), jnp.float32)
    return bp.at[0, : b.shape[0]].set(b)


def prepare_params(params):
    """Fuse layers 3&4 (no activation between them) in f32, pad hidden dims.

    Edge dims (156) are left unpadded; padded weight rows/cols and bias lanes
    are exactly zero so padded activation lanes cancel in the next layer.
    Returns (w1, b1, w2, b2, w34, b34, w5, b5, w6, b6).
    """
    (w1, b1), (w2, b2), (w3, b3), (w4, b4), (w5, b5), (w6, b6) = params
    w34 = w3 @ w4                      # (10, 10), f32
    b34 = b3 @ w4 + b4                 # (10,),   f32
    return (
        _pad_weight(w1, IN_DIM, S1_P), _pad_bias(b1, S1_P),    # (156,128), (1,128)
        _pad_weight(w2, S1_P, S2_P),   _pad_bias(b2, S2_P),    # (128,128), (1,128)
        _pad_weight(w34, S2_P, S2_P),  _pad_bias(b34, S2_P),   # (128,128), (1,128)
        _pad_weight(w5, S2_P, S1_P),   _pad_bias(b5, S1_P),    # (128,128), (1,128)
        _pad_weight(w6, S1_P, IN_DIM), _pad_bias(b6, IN_DIM),  # (128,156), (1,156)
    )


@jax.jit
def autoencoder_forward(x, kernel_params):
    """x: [B, 156] f32 -> [B, 156] bf16 (bf16 output halves HBM writeback)."""
    B = x.shape[0]

    # Adaptive batch tile: <1 tile of padding waste, large steps, and >=2 grid
    # steps when B >= 16 so both v7x TensorCores get work under "parallel".
    n_steps = max(pl.cdiv(B, MAX_TB), 2 if B >= 16 else 1)
    tb = _round_up(pl.cdiv(B, n_steps), 8)
    b_pad = _round_up(B, tb)
    grid = (b_pad // tb,)

    xp = x if b_pad == B else jnp.pad(x, ((0, b_pad - B), (0, 0)))

    x_spec = pl.BlockSpec((tb, IN_DIM), lambda i: (i, 0))
    # Weights/biases: full-array blocks, constant index_map -> VMEM-resident.
    param_specs = [pl.BlockSpec(p.shape, lambda i: (0, 0)) for p in kernel_params]
    out_spec = pl.BlockSpec((tb, IN_DIM), lambda i: (i, 0))

    out_p = pl.pallas_call(
        autoencoder_kernel,
        out_shape=jax.ShapeDtypeStruct((b_pad, IN_DIM), jnp.bfloat16),
        grid=grid,
        in_specs=[x_spec] + param_specs,
        out_specs=out_spec,
        compiler_params=pltpu.CompilerParams(
            dimension_semantics=("parallel",),
            vmem_limit_bytes=32 * 1024 * 1024,   # footprint is only a few MiB even at tb=1024
        ),
    )(xp, *kernel_params)

    return out_p if b_pad == B else out_p[:B]


def reference_forward(x, params):
    """Pure-JAX f32 reference of the PyTorch forward (unfused, 6 layers)."""
    h = x
    for (w, b), act in zip(params, HAS_SIGMOID):
        h = h @ w + b
        if act:
            h = jax.nn.sigmoid(h)
    return h


if __name__ == "__main__":
    key = jax.random.PRNGKey(0)
    key, kx, kp = jax.random.split(key, 3)

    batch = 8
    x = jax.random.uniform(kx, (batch, IN_DIM), jnp.float32)   # [8, 156]
    params = init_params(kp)
    kernel_params = prepare_params(params)

    out = autoencoder_forward(x, kernel_params)
    out = jax.block_until_ready(out)

    assert out.shape == (batch, IN_DIM)
    assert out.dtype == jnp.bfloat16
    # final Sigmoid => output in [0, 1] (bf16 rounding may touch the endpoints)
    assert bool(jnp.all((out >= 0.0) & (out <= 1.0)))

    # numerical sanity vs f32 reference (bf16 weights/activations/sigmoids)
    ref = reference_forward(x, params)
    max_err = float(jnp.max(jnp.abs(out.astype(jnp.float32) - ref)))
    assert max_err < 5e-2, f"max abs error {max_err}"

    print("KERNEL_OK")
</pallas_src>

<mosaic_0001>
module attributes {stable_mosaic.version = 11 : i64} {
  func.func @autoencoder_kernel(%arg0: i32, %arg1: memref<8x156xf32, #tpu.memory_space<vmem>>, %arg2: memref<156x128xbf16, #tpu.memory_space<vmem>>, %arg3: memref<1x128xf32, #tpu.memory_space<vmem>>, %arg4: memref<128x128xbf16, #tpu.memory_space<vmem>>, %arg5: memref<1x128xf32, #tpu.memory_space<vmem>>, %arg6: memref<128x128xbf16, #tpu.memory_space<vmem>>, %arg7: memref<1x128xf32, #tpu.memory_space<vmem>>, %arg8: memref<128x128xbf16, #tpu.memory_space<vmem>>, %arg9: memref<1x128xf32, #tpu.memory_space<vmem>>, %arg10: memref<128x156xbf16, #tpu.memory_space<vmem>>, %arg11: memref<1x156xf32, #tpu.memory_space<vmem>>, %arg12: memref<8x156xbf16, #tpu.memory_space<vmem>>) attributes {dimension_semantics = [#tpu.dimension_semantics<parallel>], iteration_bounds = array<i64: 1>, scalar_prefetch = 0 : i64, scratch_operands = 0 : i64, tpu.core_type = #tpu.core_type<tc>, window_params = [{transform_indices = @transform_0, window_bounds = array<i64: 8, 156>}, {pipeline_mode = #tpu.pipeline_mode<synchronous>, transform_indices = @transform_1, window_bounds = array<i64: 156, 128>}, {pipeline_mode = #tpu.pipeline_mode<synchronous>, transform_indices = @transform_2, window_bounds = array<i64: 1, 128>}, {pipeline_mode = #tpu.pipeline_mode<synchronous>, transform_indices = @transform_3, window_bounds = array<i64: 128, 128>}, {pipeline_mode = #tpu.pipeline_mode<synchronous>, transform_indices = @transform_4, window_bounds = array<i64: 1, 128>}, {pipeline_mode = #tpu.pipeline_mode<synchronous>, transform_indices = @transform_5, window_bounds = array<i64: 128, 128>}, {pipeline_mode = #tpu.pipeline_mode<synchronous>, transform_indices = @transform_6, window_bounds = array<i64: 1, 128>}, {pipeline_mode = #tpu.pipeline_mode<synchronous>, transform_indices = @transform_7, window_bounds = array<i64: 128, 128>}, {pipeline_mode = #tpu.pipeline_mode<synchronous>, transform_indices = @transform_8, window_bounds = array<i64: 1, 128>}, {pipeline_mode = #tpu.pipeline_mode<synchronous>, transform_indices = @transform_9, window_bounds = array<i64: 128, 156>}, {pipeline_mode = #tpu.pipeline_mode<synchronous>, transform_indices = @transform_10, window_bounds = array<i64: 1, 156>}, {transform_indices = @transform_11, window_bounds = array<i64: 8, 156>}]} {
    %c0 = arith.constant 0 : index
    %c0_0 = arith.constant 0 : index
    %0 = vector.load %arg1[%c0, %c0_0] : memref<8x156xf32, #tpu.memory_space<vmem>>, vector<8x156xf32>
    %1 = arith.truncf %0 : vector<8x156xf32> to vector<8x156xbf16>
    %c0_1 = arith.constant 0 : index
    %c0_2 = arith.constant 0 : index
    %2 = vector.load %arg2[%c0_1, %c0_2] : memref<156x128xbf16, #tpu.memory_space<vmem>>, vector<156x128xbf16>
    %cst = arith.constant dense<0.000000e+00> : vector<8x128xf32>
    %3 = tpu.matmul %1, %2, %cst {dimension_numbers = #tpu.dot_dimension_numbers<[1], [0], [0], [1], [0, 0, 1, 1], [], []>} : vector<8x156xbf16>, vector<156x128xbf16>, vector<8x128xf32> -> vector<8x128xf32>
    %c0_3 = arith.constant 0 : index
    %c0_4 = arith.constant 0 : index
    %4 = vector.load %arg3[%c0_3, %c0_4] : memref<1x128xf32, #tpu.memory_space<vmem>>, vector<1x128xf32>
    %5 = vector.broadcast %4 : vector<1x128xf32> to vector<8x128xf32>
    %6 = arith.addf %3, %5 : vector<8x128xf32>
    %cst_5 = arith.constant 5.000000e-01 : f32
    %7 = vector.broadcast %cst_5 : f32 to vector<8x128xf32>
    %8 = arith.mulf %7, %6 : vector<8x128xf32>
    %9 = arith.truncf %8 : vector<8x128xf32> to vector<8x128xbf16>
    %10 = math.tanh %9 : vector<8x128xbf16>
    %cst_6 = arith.constant 1.000000e+00 : bf16
    %11 = vector.broadcast %cst_6 : bf16 to vector<8x128xbf16>
    %12 = arith.addf %10, %11 : vector<8x128xbf16>
    %cst_7 = arith.constant 5.000000e-01 : bf16
    %13 = vector.broadcast %cst_7 : bf16 to vector<8x128xbf16>
    %14 = arith.mulf %13, %12 : vector<8x128xbf16>
    %c0_8 = arith.constant 0 : index
    %c0_9 = arith.constant 0 : index
    %15 = vector.load %arg4[%c0_8, %c0_9] : memref<128x128xbf16, #tpu.memory_space<vmem>>, vector<128x128xbf16>
    %cst_10 = arith.constant dense<0.000000e+00> : vector<8x128xf32>
    %16 = tpu.matmul %14, %15, %cst_10 {dimension_numbers = #tpu.dot_dimension_numbers<[1], [0], [0], [1], [0, 0, 1, 1], [], []>} : vector<8x128xbf16>, vector<128x128xbf16>, vector<8x128xf32> -> vector<8x128xf32>
    %c0_11 = arith.constant 0 : index
    %c0_12 = arith.constant 0 : index
    %17 = vector.load %arg5[%c0_11, %c0_12] : memref<1x128xf32, #tpu.memory_space<vmem>>, vector<1x128xf32>
    %18 = vector.broadcast %17 : vector<1x128xf32> to vector<8x128xf32>
    %19 = arith.addf %16, %18 : vector<8x128xf32>
    %cst_13 = arith.constant 5.000000e-01 : f32
    %20 = vector.broadcast %cst_13 : f32 to vector<8x128xf32>
    %21 = arith.mulf %20, %19 : vector<8x128xf32>
    %22 = arith.truncf %21 : vector<8x128xf32> to vector<8x128xbf16>
    %23 = math.tanh %22 : vector<8x128xbf16>
    %cst_14 = arith.constant 1.000000e+00 : bf16
    %24 = vector.broadcast %cst_14 : bf16 to vector<8x128xbf16>
    %25 = arith.addf %23, %24 : vector<8x128xbf16>
    %cst_15 = arith.constant 5.000000e-01 : bf16
    %26 = vector.broadcast %cst_15 : bf16 to vector<8x128xbf16>
    %27 = arith.mulf %26, %25 : vector<8x128xbf16>
    %c0_16 = arith.constant 0 : index
    %c0_17 = arith.constant 0 : index
    %28 = vector.load %arg6[%c0_16, %c0_17] : memref<128x128xbf16, #tpu.memory_space<vmem>>, vector<128x128xbf16>
    %cst_18 = arith.constant dense<0.000000e+00> : vector<8x128xf32>
    %29 = tpu.matmul %27, %28, %cst_18 {dimension_numbers = #tpu.dot_dimension_numbers<[1], [0], [0], [1], [0, 0, 1, 1], [], []>} : vector<8x128xbf16>, vector<128x128xbf16>, vector<8x128xf32> -> vector<8x128xf32>
    %c0_19 = arith.constant 0 : index
    %c0_20 = arith.constant 0 : index
    %30 = vector.load %arg7[%c0_19, %c0_20] : memref<1x128xf32, #tpu.memory_space<vmem>>, vector<1x128xf32>
    %31 = vector.broadcast %30 : vector<1x128xf32> to vector<8x128xf32>
    %32 = arith.addf %29, %31 : vector<8x128xf32>
    %cst_21 = arith.constant 5.000000e-01 : f32
    %33 = vector.broadcast %cst_21 : f32 to vector<8x128xf32>
    %34 = arith.mulf %33, %32 : vector<8x128xf32>
    %35 = arith.truncf %34 : vector<8x128xf32> to vector<8x128xbf16>
    %36 = math.tanh %35 : vector<8x128xbf16>
    %cst_22 = arith.constant 1.000000e+00 : bf16
    %37 = vector.broadcast %cst_22 : bf16 to vector<8x128xbf16>
    %38 = arith.addf %36, %37 : vector<8x128xbf16>
    %cst_23 = arith.constant 5.000000e-01 : bf16
    %39 = vector.broadcast %cst_23 : bf16 to vector<8x128xbf16>
    %40 = arith.mulf %39, %38 : vector<8x128xbf16>
    %c0_24 = arith.constant 0 : index
    %c0_25 = arith.constant 0 : index
    %41 = vector.load %arg8[%c0_24, %c0_25] : memref<128x128xbf16, #tpu.memory_space<vmem>>, vector<128x128xbf16>
    %cst_26 = arith.constant dense<0.000000e+00> : vector<8x128xf32>
    %42 = tpu.matmul %40, %41, %cst_26 {dimension_numbers = #tpu.dot_dimension_numbers<[1], [0], [0], [1], [0, 0, 1, 1], [], []>} : vector<8x128xbf16>, vector<128x128xbf16>, vector<8x128xf32> -> vector<8x128xf32>
    %c0_27 = arith.constant 0 : index
    %c0_28 = arith.constant 0 : index
    %43 = vector.load %arg9[%c0_27, %c0_28] : memref<1x128xf32, #tpu.memory_space<vmem>>, vector<1x128xf32>
    %44 = vector.broadcast %43 : vector<1x128xf32> to vector<8x128xf32>
    %45 = arith.addf %42, %44 : vector<8x128xf32>
    %cst_29 = arith.constant 5.000000e-01 : f32
    %46 = vector.broadcast %cst_29 : f32 to vector<8x128xf32>
    %47 = arith.mulf %46, %45 : vector<8x128xf32>
    %48 = arith.truncf %47 : vector<8x128xf32> to vector<8x128xbf16>
    %49 = math.tanh %48 : vector<8x128xbf16>
    %cst_30 = arith.constant 1.000000e+00 : bf16
    %50 = vector.broadcast %cst_30 : bf16 to vector<8x128xbf16>
    %51 = arith.addf %49, %50 : vector<8x128xbf16>
    %cst_31 = arith.constant 5.000000e-01 : bf16
    %52 = vector.broadcast %cst_31 : bf16 to vector<8x128xbf16>
    %53 = arith.mulf %52, %51 : vector<8x128xbf16>
    %c0_32 = arith.constant 0 : index
    %c0_33 = arith.constant 0 : index
    %54 = vector.load %arg10[%c0_32, %c0_33] : memref<128x156xbf16, #tpu.memory_space<vmem>>, vector<128x156xbf16>
    %cst_34 = arith.constant dense<0.000000e+00> : vector<8x156xf32>
    %55 = tpu.matmul %53, %54, %cst_34 {dimension_numbers = #tpu.dot_dimension_numbers<[1], [0], [0], [1], [0, 0, 1, 1], [], []>} : vector<8x128xbf16>, vector<128x156xbf16>, vector<8x156xf32> -> vector<8x156xf32>
    %c0_35 = arith.constant 0 : index
    %c0_36 = arith.constant 0 : index
    %56 = vector.load %arg11[%c0_35, %c0_36] : memref<1x156xf32, #tpu.memory_space<vmem>>, vector<1x156xf32>
    %57 = vector.broadcast %56 : vector<1x156xf32> to vector<8x156xf32>
    %58 = arith.addf %55, %57 : vector<8x156xf32>
    %cst_37 = arith.constant 5.000000e-01 : f32
    %59 = vector.broadcast %cst_37 : f32 to vector<8x156xf32>
    %60 = arith.mulf %59, %58 : vector<8x156xf32>
    %61 = arith.truncf %60 : vector<8x156xf32> to vector<8x156xbf16>
    %62 = math.tanh %61 : vector<8x156xbf16>
    %cst_38 = arith.constant 1.000000e+00 : bf16
    %63 = vector.broadcast %cst_38 : bf16 to vector<8x156xbf16>
    %64 = arith.addf %62, %63 : vector<8x156xbf16>
    %cst_39 = arith.constant 5.000000e-01 : bf16
    %65 = vector.broadcast %cst_39 : bf16 to vector<8x156xbf16>
    %66 = arith.mulf %65, %64 : vector<8x156xbf16>
    %c0_40 = arith.constant 0 : index
    %c0_41 = arith.constant 0 : index
    %67 = vector.load %arg12[%c0_40, %c0_41] : memref<8x156xbf16, #tpu.memory_space<vmem>>, vector<8x156xbf16>
    tpu.vector_store %arg12[%c0_40, %c0_41], %66 {strides = array<i32>} : memref<8x156xbf16, #tpu.memory_space<vmem>>, vector<8x156xbf16>,
    return
  }
  func.func @transform_0(%arg0: i32) -> (i32, i32) {
    %c0_i32 = arith.constant 0 : i32
    %c0_i32_0 = arith.constant 0 : i32
    return %arg0, %c0_i32 : i32, i32
  }
  func.func @transform_1(%arg0: i32) -> (i32, i32) {
    %c0_i32 = arith.constant 0 : i32
    %c0_i32_0 = arith.constant 0 : i32
    %c0_i32_1 = arith.constant 0 : i32
    return %c0_i32, %c0_i32_0 : i32, i32
  }
  func.func @transform_2(%arg0: i32) -> (i32, i32) {
    %c0_i32 = arith.constant 0 : i32
    %c0_i32_0 = arith.constant 0 : i32
    %c0_i32_1 = arith.constant 0 : i32
    return %c0_i32, %c0_i32_0 : i32, i32
  }
  func.func @transform_3(%arg0: i32) -> (i32, i32) {
    %c0_i32 = arith.constant 0 : i32
    %c0_i32_0 = arith.constant 0 : i32
    %c0_i32_1 = arith.constant 0 : i32
    return %c0_i32, %c0_i32_0 : i32, i32
  }
  func.func @transform_4(%arg0: i32) -> (i32, i32) {
    %c0_i32 = arith.constant 0 : i32
    %c0_i32_0 = arith.constant 0 : i32
    %c0_i32_1 = arith.constant 0 : i32
    return %c0_i32, %c0_i32_0 : i32, i32
  }
  func.func @transform_5(%arg0: i32) -> (i32, i32) {
    %c0_i32 = arith.constant 0 : i32
    %c0_i32_0 = arith.constant 0 : i32
    %c0_i32_1 = arith.constant 0 : i32
    return %c0_i32, %c0_i32_0 : i32, i32
  }
  func.func @transform_6(%arg0: i32) -> (i32, i32) {
    %c0_i32 = arith.constant 0 : i32
    %c0_i32_0 = arith.constant 0 : i32
    %c0_i32_1 = arith.constant 0 : i32
    return %c0_i32, %c0_i32_0 : i32, i32
  }
  func.func @transform_7(%arg0: i32) -> (i32, i32) {
    %c0_i32 = arith.constant 0 : i32
    %c0_i32_0 = arith.constant 0 : i32
    %c0_i32_1 = arith.constant 0 : i32
    return %c0_i32, %c0_i32_0 : i32, i32
  }
  func.func @transform_8(%arg0: i32) -> (i32, i32) {
    %c0_i32 = arith.constant 0 : i32
    %c0_i32_0 = arith.constant 0 : i32
    %c0_i32_1 = arith.constant 0 : i32
    return %c0_i32, %c0_i32_0 : i32, i32
  }
  func.func @transform_9(%arg0: i32) -> (i32, i32) {
    %c0_i32 = arith.constant 0 : i32
    %c0_i32_0 = arith.constant 0 : i32
    %c0_i32_1 = arith.constant 0 : i32
    return %c0_i32, %c0_i32_0 : i32, i32
  }
  func.func @transform_10(%arg0: i32) -> (i32, i32) {
    %c0_i32 = arith.constant 0 : i32
    %c0_i32_0 = arith.constant 0 : i32
    %c0_i32_1 = arith.constant 0 : i32
    return %c0_i32, %c0_i32_0 : i32, i32
  }
  func.func @transform_11(%arg0: i32) -> (i32, i32) {
    %c0_i32 = arith.constant 0 : i32
    %c0_i32_0 = arith.constant 0 : i32
    return %arg0, %c0_i32 : i32, i32
  }
}

</mosaic_0001>

<llo_original>
// kernel: autoencoder_forward.1
$region0: #{autoencoder_forward.1}
  #allocation0 [shape = 'u32[]', space=smem, size = 0x4, offset = 0x4, fixed_abs, tag = 'smem constant byte address 0x4 - core index']
  #allocation1 [shape = 'u32[144,128]{1,0:T(1,128)}', space=vmem, size = 0x12000, scoped, tag = 'internal scratch']
  %s0 = inlined_call_operand.hbm [shape: f32[8,156], index: 0, kind: input, shape index: {}]
  %s1 = inlined_call_operand.vmem [shape: bf16[156,128], index: 1, kind: input, shape index: {}]
  %s2 = inlined_call_operand.vmem [shape: f32[1,128], index: 2, kind: input, shape index: {}]
  %s3 = inlined_call_operand.vmem [shape: bf16[128,128], index: 3, kind: input, shape index: {}]
  %s4 = inlined_call_operand.vmem [shape: f32[1,128], index: 4, kind: input, shape index: {}]
  %s5 = inlined_call_operand.vmem [shape: bf16[128,128], index: 5, kind: input, shape index: {}]
  %s6 = inlined_call_operand.vmem [shape: f32[1,128], index: 6, kind: input, shape index: {}]
  %s7 = inlined_call_operand.hbm [shape: bf16[128,128], index: 7, kind: input, shape index: {}]
  %s8 = inlined_call_operand.vmem [shape: f32[1,128], index: 8, kind: input, shape index: {}]
  %s9 = inlined_call_operand.vmem [shape: bf16[128,156], index: 9, kind: input, shape index: {}]
  %s10 = inlined_call_operand.vmem [shape: f32[1,156], index: 10, kind: input, shape index: {}]
  %s11 = inlined_call_operand.hbm [shape: bf16[8,156], index: 11, kind: output, shape index: {}]
  %s12 = sld [smem:[#allocation0]]
  $region62: #{autoencoder_forward.1} parent=0
    _
  %s14 = ssub.s32 1, %s12
  %s15 = scalar_select 0, %s14, %s12
  $region1: #{autoencoder_forward.1} parent=0
    #allocation2 [shape = 'u8[8192]{0}', space=vmem, size = 0x2000, scoped, tag = 'input window, operand 0, single buffered']
    #allocation3 [shape = 's32[1]{0}', space=sflag, size = 0x4, scoped, tag = 'scoped memory for autoencoder_forward.1']
    #allocation4 [shape = 's32[1]{0}', space=sflag, size = 0x4, scoped, tag = 'scoped memory for autoencoder_forward.1']
    #allocation5 [shape = 'u8[32768]{0}', space=vmem, size = 0x8000, scoped, tag = 'input window, operand 7, single buffered']
    #allocation6 [shape = 's32[1]{0}', space=sflag, size = 0x4, scoped, tag = 'scoped memory for autoencoder_forward.1']
    #allocation7 [shape = 'u8[4096]{0}', space=vmem, size = 0x1000, scoped, tag = 'output window, operand 0, single buffered']
    %16 = vsyncpa [#allocation3], 0
    %17 = vsyncpa [#allocation6], 0
    %18 = vsyncpa [#allocation4], 0
    // Predicated region
    $region2: #{autoencoder_forward.1} parent=1 // pred_check
      _
    $region3: #{autoencoder_forward.1} parent=1 // pred_check_branch
      %20 = sbr.rel (0) target = $region5
    $region4: #{autoencoder_forward.1} parent=1 // pred_region
      %s22 = ssub.s32 256, 256
      %23 = vsyncadd [#allocation3], %s22
      %s25 = sshll.u32 [#allocation2], 4
      %s26 = int_to_ptr.vmem [resolvable:$true] %s25
      %28 = dma.hbm_to_vmem [thread:$0]  %s0, 256, %s26, [#allocation3]
    $region5: #{autoencoder_forward.1} parent=1 // pred_fallthru
      _
    // Predicated region
    $region6: #{autoencoder_forward.1} parent=1 // pred_check
      _
    $region7: #{autoencoder_forward.1} parent=1 // pred_check_branch
      %30 = sbr.rel (0) target = $region9
    $region8: #{autoencoder_forward.1} parent=1 // pred_region
      _
    $region9: #{autoencoder_forward.1} parent=1 // pred_fallthru
      _
    // Predicated region
    $region10: #{autoencoder_forward.1} parent=1 // pred_check
      _
    $region11: #{autoencoder_forward.1} parent=1 // pred_check_branch
      %32 = sbr.rel (0) target = $region13
    $region12: #{autoencoder_forward.1} parent=1 // pred_region
      _
    $region13: #{autoencoder_forward.1} parent=1 // pred_fallthru
      _
    // Predicated region
    $region14: #{autoencoder_forward.1} parent=1 // pred_check
      _
    $region15: #{autoencoder_forward.1} parent=1 // pred_check_branch
      %34 = sbr.rel (0) target = $region17
    $region16: #{autoencoder_forward.1} parent=1 // pred_region
      _
    $region17: #{autoencoder_forward.1} parent=1 // pred_fallthru
      _
    // Predicated region
    $region18: #{autoencoder_forward.1} parent=1 // pred_check
      _
    $region19: #{autoencoder_forward.1} parent=1 // pred_check_branch
      %36 = sbr.rel (0) target = $region21
    $region20: #{autoencoder_forward.1} parent=1 // pred_region
      _
    $region21: #{autoencoder_forward.1} parent=1 // pred_fallthru
      _
    // Predicated region
    $region22: #{autoencoder_forward.1} parent=1 // pred_check
      _
    $region23: #{autoencoder_forward.1} parent=1 // pred_check_branch
      %38 = sbr.rel (0) target = $region25
    $region24: #{autoencoder_forward.1} parent=1 // pred_region
      _
    $region25: #{autoencoder_forward.1} parent=1 // pred_fallthru
      _
    // Predicated region
    $region26: #{autoencoder_forward.1} parent=1 // pred_check
      _
    $region27: #{autoencoder_forward.1} parent=1 // pred_check_branch
      %40 = sbr.rel (0) target = $region29
    $region28: #{autoencoder_forward.1} parent=1 // pred_region
      _
    $region29: #{autoencoder_forward.1} parent=1 // pred_fallthru
      _
    // Predicated region
    $region30: #{autoencoder_forward.1} parent=1 // pred_check
      _
    $region31: #{autoencoder_forward.1} parent=1 // pred_check_branch
      %42 = sbr.rel (0) target = $region33
    $region32: #{autoencoder_forward.1} parent=1 // pred_region
      %s44 = ssub.s32 1024, 1024
      %45 = vsyncadd [#allocation6], %s44
      %s46 = sshll.u32 [#allocation5], 4
      %s47 = int_to_ptr.vmem [resolvable:$true] %s46
      %52 = dma.hbm_to_vmem [thread:$0]  %s7, 1024, %s47, [#allocation6], 64, 64, 4
    $region33: #{autoencoder_forward.1} parent=1 // pred_fallthru
      _
    // Predicated region
    $region34: #{autoencoder_forward.1} parent=1 // pred_check
      _
    $region35: #{autoencoder_forward.1} parent=1 // pred_check_branch
      %54 = sbr.rel (0) target = $region37
    $region36: #{autoencoder_forward.1} parent=1 // pred_region
      _
    $region37: #{autoencoder_forward.1} parent=1 // pred_fallthru
      _
    // Predicated region
    $region38: #{autoencoder_forward.1} parent=1 // pred_check
      _
    $region39: #{autoencoder_forward.1} parent=1 // pred_check_branch
      %56 = sbr.rel (0) target = $region41
    $region40: #{autoencoder_forward.1} parent=1 // pred_region
      _
    $region41: #{autoencoder_forward.1} parent=1 // pred_fallthru
      _
    // Predicated region
    $region42: #{autoencoder_forward.1} parent=1 // pred_check
      _
    $region43: #{autoencoder_forward.1} parent=1 // pred_check_branch
      %58 = sbr.rel (0) target = $region45
    $region44: #{autoencoder_forward.1} parent=1 // pred_region
      _
    $region45: #{autoencoder_forward.1} parent=1 // pred_fallthru
      _
    // Predicated region
    $region46: #{autoencoder_forward.1} parent=1 // pred_check
      _
    $region47: #{autoencoder_forward.1} parent=1 // pred_check_branch
      %60 = sbr.rel (0) target = $region49
    $region48: #{autoencoder_forward.1} parent=1 // pred_region
      %61 = dma.done [#allocation3], 256
    $region49: #{autoencoder_forward.1} parent=1 // pred_fallthru
      _
    // Predicated region
    $region50: #{autoencoder_forward.1} parent=1 // pred_check
      _
    $region51: #{autoencoder_forward.1} parent=1 // pred_check_branch
      %63 = sbr.rel (0) target = $region53
    $region52: #{autoencoder_forward.1} parent=1 // pred_region
      %64 = dma.done [#allocation6], 1024
    $region53: #{autoencoder_forward.1} parent=1 // pred_fallthru
      _
    %v68 = vld [vmem:[#allocation2] sm:$0xff]
    %v69 = vld [vmem:[#allocation2 + $0x8] sm:$0xff]
    %v70 = vpack.c.bf16 %v68, %v68
    %v71 = vpack.c.bf16 %v69, %v69
    %v72 = vld [vmem:[%s1] sm:$0xf]
    %v73 = vld [vmem:[%s1 + $0x4] sm:$0xf]
    %v74 = vld [vmem:[%s1 + $0x8] sm:$0xf]
    %v75 = vld [vmem:[%s1 + $0xc] sm:$0xf]
    %v76 = vld [vmem:[%s1 + $0x10] sm:$0xf]
    %v77 = vld [vmem:[%s1 + $0x14] sm:$0xf]
    %v78 = vld [vmem:[%s1 + $0x18] sm:$0xf]
    %v79 = vld [vmem:[%s1 + $0x1c] sm:$0xf]
    %v80 = vld [vmem:[%s1 + $0x20] sm:$0xf]
    %v81 = vld [vmem:[%s1 + $0x24] sm:$0xf]
    %v82 = vld [vmem:[%s1 + $0x28] sm:$0xf]
    %v83 = vld [vmem:[%s1 + $0x2c] sm:$0xf]
    %v84 = vld [vmem:[%s1 + $0x30] sm:$0xf]
    %v85 = vld [vmem:[%s1 + $0x34] sm:$0xf]
    %v86 = vld [vmem:[%s1 + $0x38] sm:$0xf]
    %v87 = vld [vmem:[%s1 + $0x3c] sm:$0xf]
    %v88 = vld [vmem:[%s1 + $0x40] sm:$0xf]
    %v89 = vld [vmem:[%s1 + $0x44] sm:$0xf]
    %v90 = vld [vmem:[%s1 + $0x48] sm:$0xf]
    %v91 = vld [vmem:[%s1 + $0x4c] sm:$0x3]
    %v92 = vld [vmem:[%s2] sm:$0x1]
    %v94 = vlaneseq
    %v95 = vshrl.u32 %v94, 7
    %v96 = vsub.s32 0, %v95
    %v97 = vrot.slane %v92, %v96
    %v119 = vunpack.c.l.b16 %v72
    %v120 = vunpack.c.l.b16 %v73
    %v121 = vunpack.c.l.b16 %v74
    %v122 = vunpack.c.l.b16 %v75
    %v123 = vunpack.c.l.b16 %v76
    %v124 = vunpack.c.l.b16 %v77
    %v125 = vunpack.c.l.b16 %v78
    %v126 = vunpack.c.l.b16 %v79
    %v127 = vunpack.c.l.b16 %v80
    %v128 = vunpack.c.l.b16 %v81
    %v129 = vunpack.c.l.b16 %v82
    %v130 = vunpack.c.l.b16 %v83
    %v131 = vunpack.c.l.b16 %v84
    %v132 = vunpack.c.l.b16 %v85
    %v133 = vunpack.c.l.b16 %v86
    %v134 = vunpack.c.l.b16 %v87
    %v135 = vunpack.c.l.b16 %v88
    %v136 = vunpack.c.l.b16 %v89
    %v137 = vunpack.c.l.b16 %v90
    %v138 = vunpack.c.l.b16 %v91
    %v139 = vpack.c.b16 %v120, %v119
    %v140 = vpack.c.b16 %v122, %v121
    %v141 = vpack.c.b16 %v124, %v123
    %v142 = vpack.c.b16 %v126, %v125
    %v143 = vpack.c.b16 %v128, %v127
    %v144 = vpack.c.b16 %v130, %v129
    %v145 = vpack.c.b16 %v132, %v131
    %v146 = vpack.c.b16 %v134, %v133
    %v147 = vpack.c.b16 %v136, %v135
    %v148 = vpack.c.b16 %v138, %v137
    %vm158 = vcmask 228352
    %v160 = vsel %vm158, %v71, 0
    %vm162 = vcmask 1045504
    %v164 = vsel %vm162, %v148, 0
    %166 = vmatprep.subr.bf16.mxu0 0
    %167 = vmatpush1.bf16.msra.mxu0 %v139
    %168 = vmatprep.subr.bf16.mxu0 0
    %169 = vmatpush1.bf16.msra.mxu0 %v140
    %170 = vmatprep.subr.bf16.mxu0 0
    %171 = vmatpush1.bf16.msra.mxu0 %v141
    %172 = vmatprep.subr.bf16.mxu0 0
    %173 = vmatpush1.bf16.msra.mxu0 %v142
    %174 = vmatprep.subr.bf16.mxu0 0
    %175 = vmatpush1.bf16.msra.mxu0 %v143
    %176 = vmatprep.subr.bf16.mxu0 0
    %177 = vmatpush1.bf16.msra.mxu0 %v144
    %178 = vmatprep.subr.bf16.mxu0 0
    %179 = vmatpush1.bf16.msra.mxu0 %v145
    %180 = vmatprep.subr.bf16.mxu0 0
    %181 = vmatpush1.bf16.msra.mxu0 %v146
    %182 = vmatprep.subr.bf16.mxu0 0
    %183 = vmatpush1.bf16.msra.mxu0 %v147
    %184 = vmatprep.subr.bf16.mxu0 0
    %185 = vmatpush1.bf16.msra.mxu0 %v164
    %186 = vmatprep.subr.bf16.mxu0 0
    %187 = vmatpush1.bf16.msra.mxu0 0
    %188 = vmatprep.subr.bf16.mxu0 0
    %189 = vmatpush1.bf16.msra.mxu0 0
    %190 = vmatprep.subr.bf16.mxu0 0
    %191 = vmatpush1.bf16.msra.mxu0 0
    %192 = vmatprep.subr.bf16.mxu0 0
    %193 = vmatpush1.bf16.msra.mxu0 0
    %194 = vmatprep.subr.bf16.mxu0 0
    %195 = vmatpush1.bf16.msra.mxu0 0
    %196 = vmatprep.subr.bf16.mxu0 0
    %197 = vmatpush1.bf16.msra.mxu0 0
    %198 = vmatprep.mubr.bf16.mxu0 %v160
    %199 = vmatmul.mubr.bf16.gmra.mrb[0].mxu0 %v70
    %v200 = vpop.f32.mrb[0].mxu0
    %v201 = vadd.f32 %v97, %v200
    %v202 = vpop.f32.mrb[0].mxu0
    %v203 = vpop.f32.mrb[0].mxu0
    %v204 = vpop.f32.mrb[0].mxu0
    %205 = vdwg.mxu0
    %v206 = vmul.f32 %v201, 0.5
    %v207 = vpack.c.bf16 %v206, %v206
    %v208 = vtanh.bf16.pop %v207
    %v209 = vadd.bf16 %v208, 1065369472
    %v210 = vmul.bf16 %v209, 1056980736
    %v211 = vld [vmem:[%s3] sm:$0xf]
    %v212 = vld [vmem:[%s3 + $0x4] sm:$0xf]
    %v213 = vld [vmem:[%s3 + $0x8] sm:$0xf]
    %v214 = vld [vmem:[%s3 + $0xc] sm:$0xf]
    %v215 = vld [vmem:[%s3 + $0x10] sm:$0xf]
    %v216 = vld [vmem:[%s3 + $0x14] sm:$0xf]
    %v217 = vld [vmem:[%s3 + $0x18] sm:$0xf]
    %v218 = vld [vmem:[%s3 + $0x1c] sm:$0xf]
    %v219 = vld [vmem:[%s3 + $0x20] sm:$0xf]
    %v220 = vld [vmem:[%s3 + $0x24] sm:$0xf]
    %v221 = vld [vmem:[%s3 + $0x28] sm:$0xf]
    %v222 = vld [vmem:[%s3 + $0x2c] sm:$0xf]
    %v223 = vld [vmem:[%s3 + $0x30] sm:$0xf]
    %v224 = vld [vmem:[%s3 + $0x34] sm:$0xf]
    %v225 = vld [vmem:[%s3 + $0x38] sm:$0xf]
    %v226 = vld [vmem:[%s3 + $0x3c] sm:$0xf]
    %v227 = vld [vmem:[%s4] sm:$0x1]
    %v229 = vlaneseq
    %v230 = vshrl.u32 %v229, 7
    %v231 = vsub.s32 0, %v230
    %v232 = vrot.slane %v227, %v231
    %v250 = vunpack.c.l.b16 %v211
    %v251 = vunpack.c.l.b16 %v212
    %v252 = vunpack.c.l.b16 %v213
    %v253 = vunpack.c.l.b16 %v214
    %v254 = vunpack.c.l.b16 %v215
    %v255 = vunpack.c.l.b16 %v216
    %v256 = vunpack.c.l.b16 %v217
    %v257 = vunpack.c.l.b16 %v218
    %v258 = vunpack.c.l.b16 %v219
    %v259 = vunpack.c.l.b16 %v220
    %v260 = vunpack.c.l.b16 %v221
    %v261 = vunpack.c.l.b16 %v222
    %v262 = vunpack.c.l.b16 %v223
    %v263 = vunpack.c.l.b16 %v224
    %v264 = vunpack.c.l.b16 %v225
    %v265 = vunpack.c.l.b16 %v226
    %v266 = vpack.c.b16 %v251, %v250
    %v267 = vpack.c.b16 %v253, %v252
    %v268 = vpack.c.b16 %v255, %v254
    %v269 = vpack.c.b16 %v257, %v256
    %v270 = vpack.c.b16 %v259, %v258
    %v271 = vpack.c.b16 %v261, %v260
    %v272 = vpack.c.b16 %v263, %v262
    %v273 = vpack.c.b16 %v265, %v264
    %282 = vmatprep.subr.bf16.mxu0 0
    %283 = vmatpush1.bf16.msra.mxu0 %v266
    %284 = vmatprep.subr.bf16.mxu0 0
    %285 = vmatpush1.bf16.msra.mxu0 %v267
    %286 = vmatprep.subr.bf16.mxu0 0
    %287 = vmatpush1.bf16.msra.mxu0 %v268
    %288 = vmatprep.subr.bf16.mxu0 0
    %289 = vmatpush1.bf16.msra.mxu0 %v269
    %290 = vmatprep.subr.bf16.mxu0 0
    %291 = vmatpush1.bf16.msra.mxu0 %v270
    %292 = vmatprep.subr.bf16.mxu0 0
    %293 = vmatpush1.bf16.msra.mxu0 %v271
    %294 = vmatprep.subr.bf16.mxu0 0
    %295 = vmatpush1.bf16.msra.mxu0 %v272
    %296 = vmatprep.subr.bf16.mxu0 0
    %297 = vmatpush1.bf16.msra.mxu0 %v273
    %298 = vmatprep.subr.bf16.mxu0 0
    %299 = vmatpush1.bf16.msra.mxu0 0
    %300 = vmatprep.subr.bf16.mxu0 0
    %301 = vmatpush1.bf16.msra.mxu0 0
    %302 = vmatprep.subr.bf16.mxu0 0
    %303 = vmatpush1.bf16.msra.mxu0 0
    %304 = vmatprep.subr.bf16.mxu0 0
    %305 = vmatpush1.bf16.msra.mxu0 0
    %306 = vmatprep.subr.bf16.mxu0 0
    %307 = vmatpush1.bf16.msra.mxu0 0
    %308 = vmatprep.subr.bf16.mxu0 0
    %309 = vmatpush1.bf16.msra.mxu0 0
    %310 = vmatprep.subr.bf16.mxu0 0
    %311 = vmatpush1.bf16.msra.mxu0 0
    %312 = vmatprep.subr.bf16.mxu0 0
    %313 = vmatpush1.bf16.msra.mxu0 0
    %314 = vmatprep.mubr.bf16.mxu0 0
    %315 = vmatmul.mubr.bf16.gmra.mrb[0].mxu0 %v210
    %v316 = vpop.f32.mrb[0].mxu0
    %v317 = vadd.f32 %v232, %v316
    %v318 = vpop.f32.mrb[0].mxu0
    %v319 = vpop.f32.mrb[0].mxu0
    %v320 = vpop.f32.mrb[0].mxu0
    %321 = vdwg.mxu0
    %v322 = vmul.f32 %v317, 0.5
    %v323 = vpack.c.bf16 %v322, %v322
    %v324 = vtanh.bf16.pop %v323
    %v325 = vadd.bf16 %v324, 1065369472
    %v326 = vmul.bf16 %v325, 1056980736
    %v327 = vld [vmem:[%s5] sm:$0xf]
    %v328 = vld [vmem:[%s5 + $0x4] sm:$0xf]
    %v329 = vld [vmem:[%s5 + $0x8] sm:$0xf]
    %v330 = vld [vmem:[%s5 + $0xc] sm:$0xf]
    %v331 = vld [vmem:[%s5 + $0x10] sm:$0xf]
    %v332 = vld [vmem:[%s5 + $0x14] sm:$0xf]
    %v333 = vld [vmem:[%s5 + $0x18] sm:$0xf]
    %v334 = vld [vmem:[%s5 + $0x1c] sm:$0xf]
    %v335 = vld [vmem:[%s5 + $0x20] sm:$0xf]
    %v336 = vld [vmem:[%s5 + $0x24] sm:$0xf]
    %v337 = vld [vmem:[%s5 + $0x28] sm:$0xf]
    %v338 = vld [vmem:[%s5 + $0x2c] sm:$0xf]
    %v339 = vld [vmem:[%s5 + $0x30] sm:$0xf]
    %v340 = vld [vmem:[%s5 + $0x34] sm:$0xf]
    %v341 = vld [vmem:[%s5 + $0x38] sm:$0xf]
    %v342 = vld [vmem:[%s5 + $0x3c] sm:$0xf]
    %v343 = vld [vmem:[%s6] sm:$0x1]
    %v345 = vlaneseq
    %v346 = vshrl.u32 %v345, 7
    %v347 = vsub.s32 0, %v346
    %v348 = vrot.slane %v343, %v347
    %v366 = vunpack.c.l.b16 %v327
    %v367 = vunpack.c.l.b16 %v328
    %v368 = vunpack.c.l.b16 %v329
    %v369 = vunpack.c.l.b16 %v330
    %v370 = vunpack.c.l.b16 %v331
    %v371 = vunpack.c.l.b16 %v332
    %v372 = vunpack.c.l.b16 %v333
    %v373 = vunpack.c.l.b16 %v334
    %v374 = vunpack.c.l.b16 %v335
    %v375 = vunpack.c.l.b16 %v336
    %v376 = vunpack.c.l.b16 %v337
    %v377 = vunpack.c.l.b16 %v338
    %v378 = vunpack.c.l.b16 %v339
    %v379 = vunpack.c.l.b16 %v340
    %v380 = vunpack.c.l.b16 %v341
    %v381 = vunpack.c.l.b16 %v342
    %v382 = vpack.c.b16 %v367, %v366
    %v383 = vpack.c.b16 %v369, %v368
    %v384 = vpack.c.b16 %v371, %v370
    %v385 = vpack.c.b16 %v373, %v372
    %v386 = vpack.c.b16 %v375, %v374
    %v387 = vpack.c.b16 %v377, %v376
    %v388 = vpack.c.b16 %v379, %v378
    %v389 = vpack.c.b16 %v381, %v380
    %398 = vmatprep.subr.bf16.mxu0 0
    %399 = vmatpush1.bf16.msra.mxu0 %v382
    %400 = vmatprep.subr.bf16.mxu0 0
    %401 = vmatpush1.bf16.msra.mxu0 %v383
    %402 = vmatprep.subr.bf16.mxu0 0
    %403 = vmatpush1.bf16.msra.mxu0 %v384
    %404 = vmatprep.subr.bf16.mxu0 0
    %405 = vmatpush1.bf16.msra.mxu0 %v385
    %406 = vmatprep.subr.bf16.mxu0 0
    %407 = vmatpush1.bf16.msra.mxu0 %v386
    %408 = vmatprep.subr.bf16.mxu0 0
    %409 = vmatpush1.bf16.msra.mxu0 %v387
    %410 = vmatprep.subr.bf16.mxu0 0
    %411 = vmatpush1.bf16.msra.mxu0 %v388
    %412 = vmatprep.subr.bf16.mxu0 0
    %413 = vmatpush1.bf16.msra.mxu0 %v389
    %414 = vmatprep.subr.bf16.mxu0 0
    %415 = vmatpush1.bf16.msra.mxu0 0
    %416 = vmatprep.subr.bf16.mxu0 0
    %417 = vmatpush1.bf16.msra.mxu0 0
    %418 = vmatprep.subr.bf16.mxu0 0
    %419 = vmatpush1.bf16.msra.mxu0 0
    %420 = vmatprep.subr.bf16.mxu0 0
    %421 = vmatpush1.bf16.msra.mxu0 0
    %422 = vmatprep.subr.bf16.mxu0 0
    %423 = vmatpush1.bf16.msra.mxu0 0
    %424 = vmatprep.subr.bf16.mxu0 0
    %425 = vmatpush1.bf16.msra.mxu0 0
    %426 = vmatprep.subr.bf16.mxu0 0
    %427 = vmatpush1.bf16.msra.mxu0 0
    %428 = vmatprep.subr.bf16.mxu0 0
    %429 = vmatpush1.bf16.msra.mxu0 0
    %430 = vmatprep.mubr.bf16.mxu0 0
    %431 = vmatmul.mubr.bf16.gmra.mrb[0].mxu0 %v326
    %v432 = vpop.f32.mrb[0].mxu0
    %v433 = vadd.f32 %v348, %v432
    %v434 = vpop.f32.mrb[0].mxu0
    %v435 = vpop.f32.mrb[0].mxu0
    %v436 = vpop.f32.mrb[0].mxu0
    %437 = vdwg.mxu0
    %v438 = vmul.f32 %v433, 0.5
    %v439 = vpack.c.bf16 %v438, %v438
    %v440 = vtanh.bf16.pop %v439
    %v441 = vadd.bf16 %v440, 1065369472
    %v442 = vmul.bf16 %v441, 1056980736
    %v443 = vld [vmem:[#allocation5] sm:$0xf]
    %v444 = vld [vmem:[#allocation5 + $0x4] sm:$0xf]
    %v445 = vld [vmem:[#allocation5 + $0x8] sm:$0xf]
    %v446 = vld [vmem:[#allocation5 + $0xc] sm:$0xf]
    %v447 = vld [vmem:[#allocation5 + $0x10] sm:$0xf]
    %v448 = vld [vmem:[#allocation5 + $0x14] sm:$0xf]
    %v449 = vld [vmem:[#allocation5 + $0x18] sm:$0xf]
    %v450 = vld [vmem:[#allocation5 + $0x1c] sm:$0xf]
    %v451 = vld [vmem:[#allocation5 + $0x20] sm:$0xf]
    %v452 = vld [vmem:[#allocation5 + $0x24] sm:$0xf]
    %v453 = vld [vmem:[#allocation5 + $0x28] sm:$0xf]
    %v454 = vld [vmem:[#allocation5 + $0x2c] sm:$0xf]
    %v455 = vld [vmem:[#allocation5 + $0x30] sm:$0xf]
    %v456 = vld [vmem:[#allocation5 + $0x34] sm:$0xf]
    %v457 = vld [vmem:[#allocation5 + $0x38] sm:$0xf]
    %v458 = vld [vmem:[#allocation5 + $0x3c] sm:$0xf]
    %v459 = vld [vmem:[%s8] sm:$0x1]
    %v461 = vlaneseq
    %v462 = vshrl.u32 %v461, 7
    %v463 = vsub.s32 0, %v462
    %v464 = vrot.slane %v459, %v463
    %v482 = vunpack.c.l.b16 %v443
    %v483 = vunpack.c.l.b16 %v444
    %v484 = vunpack.c.l.b16 %v445
    %v485 = vunpack.c.l.b16 %v446
    %v486 = vunpack.c.l.b16 %v447
    %v487 = vunpack.c.l.b16 %v448
    %v488 = vunpack.c.l.b16 %v449
    %v489 = vunpack.c.l.b16 %v450
    %v490 = vunpack.c.l.b16 %v451
    %v491 = vunpack.c.l.b16 %v452
    %v492 = vunpack.c.l.b16 %v453
    %v493 = vunpack.c.l.b16 %v454
    %v494 = vunpack.c.l.b16 %v455
    %v495 = vunpack.c.l.b16 %v456
    %v496 = vunpack.c.l.b16 %v457
    %v497 = vunpack.c.l.b16 %v458
    %v498 = vpack.c.b16 %v483, %v482
    %v499 = vpack.c.b16 %v485, %v484
    %v500 = vpack.c.b16 %v487, %v486
    %v501 = vpack.c.b16 %v489, %v488
    %v502 = vpack.c.b16 %v491, %v490
    %v503 = vpack.c.b16 %v493, %v492
    %v504 = vpack.c.b16 %v495, %v494
    %v505 = vpack.c.b16 %v497, %v496
    %514 = vmatprep.subr.bf16.mxu0 0
    %515 = vmatpush1.bf16.msra.mxu0 %v498
    %516 = vmatprep.subr.bf16.mxu0 0
    %517 = vmatpush1.bf16.msra.mxu0 %v499
    %518 = vmatprep.subr.bf16.mxu0 0
    %519 = vmatpush1.bf16.msra.mxu0 %v500
    %520 = vmatprep.subr.bf16.mxu0 0
    %521 = vmatpush1.bf16.msra.mxu0 %v501
    %522 = vmatprep.subr.bf16.mxu0 0
    %523 = vmatpush1.bf16.msra.mxu0 %v502
    %524 = vmatprep.subr.bf16.mxu0 0
    %525 = vmatpush1.bf16.msra.mxu0 %v503
    %526 = vmatprep.subr.bf16.mxu0 0
    %527 = vmatpush1.bf16.msra.mxu0 %v504
    %528 = vmatprep.subr.bf16.mxu0 0
    %529 = vmatpush1.bf16.msra.mxu0 %v505
    %530 = vmatprep.subr.bf16.mxu0 0
    %531 = vmatpush1.bf16.msra.mxu0 0
    %532 = vmatprep.subr.bf16.mxu0 0
    %533 = vmatpush1.bf16.msra.mxu0 0
    %534 = vmatprep.subr.bf16.mxu0 0
    %535 = vmatpush1.bf16.msra.mxu0 0
    %536 = vmatprep.subr.bf16.mxu0 0
    %537 = vmatpush1.bf16.msra.mxu0 0
    %538 = vmatprep.subr.bf16.mxu0 0
    %539 = vmatpush1.bf16.msra.mxu0 0
    %540 = vmatprep.subr.bf16.mxu0 0
    %541 = vmatpush1.bf16.msra.mxu0 0
    %542 = vmatprep.subr.bf16.mxu0 0
    %543 = vmatpush1.bf16.msra.mxu0 0
    %544 = vmatprep.subr.bf16.mxu0 0
    %545 = vmatpush1.bf16.msra.mxu0 0
    %546 = vmatprep.mubr.bf16.mxu0 0
    %547 = vmatmul.mubr.bf16.gmra.mrb[0].mxu0 %v442
    %v548 = vpop.f32.mrb[0].mxu0
    %v549 = vadd.f32 %v464, %v548
    %v550 = vpop.f32.mrb[0].mxu0
    %v551 = vpop.f32.mrb[0].mxu0
    %v552 = vpop.f32.mrb[0].mxu0
    %553 = vdwg.mxu0
    %v554 = vmul.f32 %v549, 0.5
    %v555 = vpack.c.bf16 %v554, %v554
    %v556 = vtanh.bf16.pop %v555
    %v557 = vadd.bf16 %v556, 1065369472
    %v558 = vmul.bf16 %v557, 1056980736
    %v559 = vld [vmem:[%s9] sm:$0xff]
    %v560 = vld [vmem:[%s9 + $0x8] sm:$0xff]
    %v561 = vld [vmem:[%s9 + $0x10] sm:$0xff]
    %v562 = vld [vmem:[%s9 + $0x18] sm:$0xff]
    %v563 = vld [vmem:[%s9 + $0x20] sm:$0xff]
    %v564 = vld [vmem:[%s9 + $0x28] sm:$0xff]
    %v565 = vld [vmem:[%s9 + $0x30] sm:$0xff]
    %v566 = vld [vmem:[%s9 + $0x38] sm:$0xff]
    %v567 = vld [vmem:[%s9 + $0x40] sm:$0xff]
    %v568 = vld [vmem:[%s9 + $0x48] sm:$0xff]
    %v569 = vld [vmem:[%s9 + $0x50] sm:$0xff]
    %v570 = vld [vmem:[%s9 + $0x58] sm:$0xff]
    %v571 = vld [vmem:[%s9 + $0x60] sm:$0xff]
    %v572 = vld [vmem:[%s9 + $0x68] sm:$0xff]
    %v573 = vld [vmem:[%s9 + $0x70] sm:$0xff]
    %v574 = vld [vmem:[%s9 + $0x78] sm:$0xff]
    %v575 = vld [vmem:[%s10] sm:$0x3]
    %v577 = vlaneseq
    %v578 = vshrl.u32 %v577, 7
    %v579 = vsub.s32 0, %v578
    %v580 = vrot.slane %v575, %v579
    %v581 = vlaneseq
    %v582 = vshrl.u32 %v581, 7
    %v583 = vsub.s32 1, %v582
    %v584 = vrot.slane %v575, %v583
    %v603 = vunpack.c.l.b16 %v559
    %v604 = vunpack.c.h.b16 %v559
    %v605 = vunpack.c.l.b16 %v560
    %v606 = vunpack.c.h.b16 %v560
    %v607 = vunpack.c.l.b16 %v561
    %v608 = vunpack.c.h.b16 %v561
    %v609 = vunpack.c.l.b16 %v562
    %v610 = vunpack.c.h.b16 %v562
    %v611 = vunpack.c.l.b16 %v563
    %v612 = vunpack.c.h.b16 %v563
    %v613 = vunpack.c.l.b16 %v564
    %v614 = vunpack.c.h.b16 %v564
    %v615 = vunpack.c.l.b16 %v565
    %v616 = vunpack.c.h.b16 %v565
    %v617 = vunpack.c.l.b16 %v566
    %v618 = vunpack.c.h.b16 %v566
    %v619 = vunpack.c.l.b16 %v567
    %v620 = vunpack.c.h.b16 %v567
    %v621 = vunpack.c.l.b16 %v568
    %v622 = vunpack.c.h.b16 %v568
    %v623 = vunpack.c.l.b16 %v569
    %v624 = vunpack.c.h.b16 %v569
    %v625 = vunpack.c.l.b16 %v570
    %v626 = vunpack.c.h.b16 %v570
    %v627 = vunpack.c.l.b16 %v571
    %v628 = vunpack.c.h.b16 %v571
    %v629 = vunpack.c.l.b16 %v572
    %v630 = vunpack.c.h.b16 %v572
    %v631 = vunpack.c.l.b16 %v573
    %v632 = vunpack.c.h.b16 %v573
    %v633 = vunpack.c.l.b16 %v574
    %v634 = vunpack.c.h.b16 %v574
    %v635 = vpack.c.b16 %v605, %v603
    %v636 = vpack.c.b16 %v606, %v604
    %v637 = vpack.c.b16 %v609, %v607
    %v638 = vpack.c.b16 %v610, %v608
    %v639 = vpack.c.b16 %v613, %v611
    %v640 = vpack.c.b16 %v614, %v612
    %v641 = vpack.c.b16 %v617, %v615
    %v642 = vpack.c.b16 %v618, %v616
    %v643 = vpack.c.b16 %v621, %v619
    %v644 = vpack.c.b16 %v622, %v620
    %v645 = vpack.c.b16 %v625, %v623
    %v646 = vpack.c.b16 %v626, %v624
    %v647 = vpack.c.b16 %v629, %v627
    %v648 = vpack.c.b16 %v630, %v628
    %v649 = vpack.c.b16 %v633, %v631
    %v650 = vpack.c.b16 %v634, %v632
    %667 = vmatprep.subr.bf16.mxu0 %v636
    %668 = vmatpush1.bf16.msra.mxu0 %v635
    %669 = vmatprep.subr.bf16.mxu0 %v638
    %670 = vmatpush1.bf16.msra.mxu0 %v637
    %671 = vmatprep.subr.bf16.mxu0 %v640
    %672 = vmatpush1.bf16.msra.mxu0 %v639
    %673 = vmatprep.subr.bf16.mxu0 %v642
    %674 = vmatpush1.bf16.msra.mxu0 %v641
    %675 = vmatprep.subr.bf16.mxu0 %v644
    %676 = vmatpush1.bf16.msra.mxu0 %v643
    %677 = vmatprep.subr.bf16.mxu0 %v646
    %678 = vmatpush1.bf16.msra.mxu0 %v645
    %679 = vmatprep.subr.bf16.mxu0 %v648
    %680 = vmatpush1.bf16.msra.mxu0 %v647
    %681 = vmatprep.subr.bf16.mxu0 %v650
    %682 = vmatpush1.bf16.msra.mxu0 %v649
    %683 = vmatprep.subr.bf16.mxu0 0
    %684 = vmatpush1.bf16.msra.mxu0 0
    %685 = vmatprep.subr.bf16.mxu0 0
    %686 = vmatpush1.bf16.msra.mxu0 0
    %687 = vmatprep.subr.bf16.mxu0 0
    %688 = vmatpush1.bf16.msra.mxu0 0
    %689 = vmatprep.subr.bf16.mxu0 0
    %690 = vmatpush1.bf16.msra.mxu0 0
    %691 = vmatprep.subr.bf16.mxu0 0
    %692 = vmatpush1.bf16.msra.mxu0 0
    %693 = vmatprep.subr.bf16.mxu0 0
    %694 = vmatpush1.bf16.msra.mxu0 0
    %695 = vmatprep.subr.bf16.mxu0 0
    %696 = vmatpush1.bf16.msra.mxu0 0
    %697 = vmatprep.subr.bf16.mxu0 0
    %698 = vmatpush1.bf16.msra.mxu0 0
    %699 = vmatprep.mubr.bf16.mxu0 0
    %700 = vmatmul.mubr.bf16.gmra.mrb[0].mxu0 %v558
    %v701 = vpop.f32.mrb[0].mxu0
    %v702 = vadd.f32 %v580, %v701
    %v703 = vpop.f32.mrb[0].mxu0
    %v704 = vadd.f32 %v584, %v703
    %v705 = vpop.f32.mrb[0].mxu0
    %v706 = vpop.f32.mrb[0].mxu0
    %707 = vdwg.mxu0
    %v708 = vmul.f32 %v702, 0.5
    %v709 = vmul.f32 %v704, 0.5
    %v710 = vpack.c.bf16 %v708, %v708
    %v711 = vpack.c.bf16 %v709, %v709
    %v712 = vtanh.bf16.pop %v710
    %v713 = vtanh.bf16.pop %v711
    %v714 = vadd.bf16 %v712, 1065369472
    %v715 = vadd.bf16 %v713, 1065369472
    %v716 = vmul.bf16 %v714, 1056980736
    %v717 = vmul.bf16 %v715, 1056980736
    %v720 = vunpack.c.l.b16 %v716
    %v721 = vunpack.c.l.b16 %v717
    %v722 = vpack.c.b16 %v721, %v720
    %vm724 = vcmask 1043456
    %vm725 = vcmask 228356
    %vm726 = vmor %vm725, %vm724
    %727 = vst.msk [vmem:[#allocation7] sm:$0xff] %vm726, %v722
    // Predicated region
    $region54: #{autoencoder_forward.1} parent=1 // pred_check
      _
    $region55: #{autoencoder_forward.1} parent=1 // pred_check_branch
      %729 = sbr.rel (0) target = $region57
    $region56: #{autoencoder_forward.1} parent=1 // pred_region
      %s731 = ssub.s32 128, 128
      %732 = vsyncadd [#allocation4], %s731
      %s734 = sshll.u32 [#allocation7], 4
      %s735 = int_to_ptr.vmem [resolvable:$true] %s734
      %737 = dma.vmem_to_hbm [thread:$0]  %s735, 128, %s11, [#allocation4]
    $region57: #{autoencoder_forward.1} parent=1 // pred_fallthru
      _
    // Predicated region
    $region58: #{autoencoder_forward.1} parent=1 // pred_check
      _
    $region59: #{autoencoder_forward.1} parent=1 // pred_check_branch
      %739 = sbr.rel (0) target = $region61
    $region60: #{autoencoder_forward.1} parent=1 // pred_region
      %740 = dma.done [#allocation4], 128
    $region61: #{autoencoder_forward.1} parent=1 // pred_fallthru
      _
    %741 = vsyncpa [#allocation3], 1
    %742 = vsyncpa [#allocation6], 1
    %743 = vsyncpa [#allocation4], 1

</llo_original>
